<compile_context>
chip_gen: v7x
topology: tpu7x:2x2x1
jax: 0.10.0
libtpu: 0.0.40
codegen_flags: <defaults>
</compile_context>

<pallas_src>
import functools

import jax
import jax.numpy as jnp
import numpy as np
from jax.experimental import pallas as pl
from jax.experimental.pallas import tpu as pltpu


# ----------------------------------------------------------------------------- #
# Pallas kernel: all d gated-transition blocks fused via packed weights.
# ----------------------------------------------------------------------------- #
def _gated_transition_kernel(
    z_ref,                 # (TB, Zs)
    w1_ref, b1_ref,        # (Zs, 2*Ts+Zs), (1, 2*Ts+Zs)  columns: [gate_h | pm_h | loc]
    w2_ref, b2_ref,        # (2*Ts, 2*Zs),  (1, 2*Zs)      columns: [gate_pre | pm]
    wsig_ref, bsig_ref,    # (Zs, Zs),      (1, Zs)        block-diagonal lin_sig
    loc_ref, scale_ref,    # (TB, Zs) each
    *, sum_t, sum_z,
):
    z = z_ref[...]

    # Stage 1: one matmul produces the gate-hidden, pm-hidden and z_to_loc paths.
    y1 = jnp.dot(z, w1_ref[...], preferred_element_type=jnp.float32) + b1_ref[...]
    h = jnp.maximum(y1[:, : 2 * sum_t], 0.0)      # relu'd [_gate | _proposed_mean] hidden
    z_to_loc = y1[:, 2 * sum_t:]                  # lin_z_to_loc(z) (no relu)

    # Stage 2: one matmul produces gate pre-activation and proposed_mean.
    y2 = jnp.dot(h, w2_ref[...], preferred_element_type=jnp.float32) + b2_ref[...]
    gate = jax.nn.sigmoid(y2[:, :sum_z])
    proposed_mean = y2[:, sum_z:]

    # z_loc = (1 - gate) * lin_z_to_loc(z) + gate * proposed_mean
    loc_ref[...] = (1.0 - gate) * z_to_loc + gate * proposed_mean

    # z_scale = softplus(lin_sig(relu(proposed_mean)))
    relu_pm = jnp.maximum(proposed_mean, 0.0)
    sig_pre = (
        jnp.dot(relu_pm, wsig_ref[...], preferred_element_type=jnp.float32)
        + bsig_ref[...]
    )
    scale_ref[...] = jax.nn.softplus(sig_pre)


def _batch_tiling(batch, max_tile=512):
    """Pick a batch tile (second-last dim). Returns (tile, padded_batch)."""
    if batch <= max_tile:
        return batch, batch                      # single full-extent block (always legal)
    tile = max(8, (max_tile // 8) * 8)           # keep it sublane-aligned
    padded = ((batch + tile - 1) // tile) * tile
    return tile, padded


# ----------------------------------------------------------------------------- #
# Parameter construction & packing.
# ----------------------------------------------------------------------------- #
def _init_block(key, z_dim, transition_dim):
    ks = jax.random.split(key, 10)
    s = 0.1

    def w(k, din, dout):
        return (s * jax.random.normal(k, (din, dout))).astype(jnp.float32)

    def b(k, dout):
        return (s * jax.random.normal(k, (1, dout))).astype(jnp.float32)

    return {
        "wg1": w(ks[0], z_dim, transition_dim), "bg1": b(ks[1], transition_dim),
        "wg2": w(ks[2], transition_dim, z_dim), "bg2": b(ks[3], z_dim),
        "wp1": w(ks[4], z_dim, transition_dim), "bp1": b(ks[5], transition_dim),
        "wp2": w(ks[6], transition_dim, z_dim), "bp2": b(ks[7], z_dim),
        "wsig": w(ks[8], z_dim, z_dim),         "bsig": b(ks[9], z_dim),
        # nn.init.eye_ / zeros_ on lin_z_to_loc (init-time values only; not special-cased)
        "wloc": jnp.eye(z_dim, dtype=jnp.float32),
        "bloc": jnp.zeros((1, z_dim), dtype=jnp.float32),
    }


def _pack_params(blocks, z_dims, t_dims):
    """Pack per-block weights into block-diagonal / concatenated matrices."""
    sum_z, sum_t = sum(z_dims), sum(t_dims)
    W1 = jnp.zeros((sum_z, 2 * sum_t + sum_z), jnp.float32)
    b1 = jnp.zeros((1, 2 * sum_t + sum_z), jnp.float32)
    W2 = jnp.zeros((2 * sum_t, 2 * sum_z), jnp.float32)
    b2 = jnp.zeros((1, 2 * sum_z), jnp.float32)
    Wsig = jnp.zeros((sum_z, sum_z), jnp.float32)
    bsig = jnp.zeros((1, sum_z), jnp.float32)

    z_off = t_off = 0
    for i, p in enumerate(blocks):
        zd, td = z_dims[i], t_dims[i]
        zs = slice(z_off, z_off + zd)
        ts = slice(t_off, t_off + td)
        pm_ts = slice(sum_t + t_off, sum_t + t_off + td)     # pm-hidden column group
        loc_zs = slice(2 * sum_t + z_off, 2 * sum_t + z_off + zd)
        pm_zs = slice(sum_z + z_off, sum_z + z_off + zd)

        # Stage 1 columns: [gate_hidden | pm_hidden | z_to_loc]
        W1 = W1.at[zs, ts].set(p["wg1"])
        W1 = W1.at[zs, pm_ts].set(p["wp1"])
        W1 = W1.at[zs, loc_zs].set(p["wloc"])
        b1 = b1.at[:, ts].set(p["bg1"])
        b1 = b1.at[:, pm_ts].set(p["bp1"])
        b1 = b1.at[:, loc_zs].set(p["bloc"])

        # Stage 2 rows: [gate_hidden | pm_hidden], columns: [gate_pre | proposed_mean]
        W2 = W2.at[ts, zs].set(p["wg2"])
        W2 = W2.at[sum_t + t_off:sum_t + t_off + td, pm_zs].set(p["wp2"])
        b2 = b2.at[:, zs].set(p["bg2"])
        b2 = b2.at[:, pm_zs].set(p["bp2"])

        # Stage 3: block-diagonal lin_sig
        Wsig = Wsig.at[zs, zs].set(p["wsig"])
        bsig = bsig.at[:, zs].set(p["bsig"])

        z_off += zd
        t_off += td

    return dict(W1=W1, b1=b1, W2=W2, b2=b2, Wsig=Wsig, bsig=bsig)


# ----------------------------------------------------------------------------- #
# Model wrapper.
# ----------------------------------------------------------------------------- #
class GatedTransitionPallas:
    def __init__(self, z_dims, transition_dims, key, max_batch_tile=512):
        self.d = len(z_dims)
        self.z_dims = list(z_dims)
        if isinstance(transition_dims, int):
            transition_dims = [transition_dims] * self.d
        assert len(transition_dims) == self.d
        self.t_dims = list(transition_dims)
        self.sum_z = sum(self.z_dims)
        self.sum_t = sum(self.t_dims)
        self.max_batch_tile = max_batch_tile

        keys = jax.random.split(key, self.d)
        # block 0 == shared_transition, blocks 1..d-1 == individual_transitions
        self.blocks = [
            _init_block(keys[i], self.z_dims[i], self.t_dims[i]) for i in range(self.d)
        ]
        self.packed = _pack_params(self.blocks, self.z_dims, self.t_dims)
        # TODO(synk): optionally cast packed weights to bfloat16 (keep f32 accum)
        # on v6e/v7x to halve activation/weight HBM traffic; kept f32 here for
        # bit-tight parity with the reference.

    def __call__(self, z_t):
        B, feat = z_t.shape
        assert feat == self.sum_z, (
            f"Expected last dim {self.sum_z}, got {feat}"
        )
        z_t = z_t.astype(jnp.float32)

        tb, bp = _batch_tiling(B, self.max_batch_tile)
        if bp != B:
            z_t = jnp.pad(z_t, ((0, bp - B), (0, 0)))

        p = self.packed
        zs, ts = self.sum_z, self.sum_t

        z_spec = pl.BlockSpec((tb, zs), lambda i: (i, 0))
        out_spec = pl.BlockSpec((tb, zs), lambda i: (i, 0))

        def resident(arr):
            # Constant index_map -> block never changes -> weights stay VMEM-resident
            # across batch-grid steps (no re-DMA).
            return pl.BlockSpec(arr.shape, lambda i: (0, 0))

        loc, scale = pl.pallas_call(
            functools.partial(_gated_transition_kernel, sum_t=ts, sum_z=zs),
            grid=(bp // tb,),
            in_specs=[
                z_spec,
                resident(p["W1"]), resident(p["b1"]),
                resident(p["W2"]), resident(p["b2"]),
                resident(p["Wsig"]), resident(p["bsig"]),
            ],
            out_specs=(out_spec, out_spec),
            out_shape=(
                jax.ShapeDtypeStruct((bp, zs), jnp.float32),
                jax.ShapeDtypeStruct((bp, zs), jnp.float32),
            ),
            compiler_params=pltpu.CompilerParams(
                dimension_semantics=("parallel",),
            ),
        )(z_t, p["W1"], p["b1"], p["W2"], p["b2"], p["Wsig"], p["bsig"])

        return loc[:B], scale[:B]


# ----------------------------------------------------------------------------- #
# Pure-JAX reference (mirrors the PyTorch forward exactly, per-block, unpacked).
# ----------------------------------------------------------------------------- #
def _ref_block(z, p):
    _gate = jax.nn.relu(z @ p["wg1"] + p["bg1"])
    gate = jax.nn.sigmoid(_gate @ p["wg2"] + p["bg2"])
    _pm = jax.nn.relu(z @ p["wp1"] + p["bp1"])
    pm = _pm @ p["wp2"] + p["bp2"]
    z_loc = (1.0 - gate) * (z @ p["wloc"] + p["bloc"]) + gate * pm
    z_scale = jax.nn.softplus(jax.nn.relu(pm) @ p["wsig"] + p["bsig"])
    return z_loc, z_scale


def _ref_forward(model, z_t):
    locs, scales = [], []
    start = 0
    for i in range(model.d):
        zi = z_t[:, start:start + model.z_dims[i]]
        l, s = _ref_block(zi, model.blocks[i])
        locs.append(l)
        scales.append(s)
        start += model.z_dims[i]
    return jnp.concatenate(locs, axis=-1), jnp.concatenate(scales, axis=-1)


def _check(model, z_t):
    loc, scale = model(z_t)
    jax.block_until_ready((loc, scale))
    ref_loc, ref_scale = _ref_forward(model, z_t)
    np.testing.assert_allclose(np.asarray(loc), np.asarray(ref_loc),
                               rtol=1e-5, atol=1e-5)
    np.testing.assert_allclose(np.asarray(scale), np.asarray(ref_scale),
                               rtol=1e-5, atol=1e-5)


if __name__ == "__main__":
    key = jax.random.PRNGKey(0)
    k1, k2, kd1, kd2 = jax.random.split(key, 4)

    # Test 1: uniform block sizes, single batch tile.
    z_dims = [8, 8]
    model = GatedTransitionPallas(z_dims, 16, k1)
    z_t = jax.random.normal(kd1, (4, sum(z_dims)), dtype=jnp.float32)
    _check(model, z_t)

    # Test 2: ragged block sizes, multi-tile batch grid (exercises padding + pipeline).
    z_dims2 = [8, 4, 8]
    model2 = GatedTransitionPallas(z_dims2, [16, 12, 16], k2, max_batch_tile=16)
    z_t2 = jax.random.normal(kd2, (40, sum(z_dims2)), dtype=jnp.float32)
    _check(model2, z_t2)

    print("KERNEL_OK")
</pallas_src>

<mosaic_0001>
module attributes {stable_mosaic.version = 11 : i64} {
  func.func @_gated_transition_kernel(%arg0: i32, %arg1: memref<4x16xf32, #tpu.memory_space<vmem>>, %arg2: memref<16x80xf32, #tpu.memory_space<vmem>>, %arg3: memref<1x80xf32, #tpu.memory_space<vmem>>, %arg4: memref<64x32xf32, #tpu.memory_space<vmem>>, %arg5: memref<1x32xf32, #tpu.memory_space<vmem>>, %arg6: memref<16x16xf32, #tpu.memory_space<vmem>>, %arg7: memref<1x16xf32, #tpu.memory_space<vmem>>, %arg8: memref<4x16xf32, #tpu.memory_space<vmem>>, %arg9: memref<4x16xf32, #tpu.memory_space<vmem>>) attributes {dimension_semantics = [#tpu.dimension_semantics<parallel>], iteration_bounds = array<i64: 1>, scalar_prefetch = 0 : i64, scratch_operands = 0 : i64, tpu.core_type = #tpu.core_type<tc>, window_params = [{transform_indices = @transform_0, window_bounds = array<i64: 4, 16>}, {pipeline_mode = #tpu.pipeline_mode<synchronous>, transform_indices = @transform_1, window_bounds = array<i64: 16, 80>}, {pipeline_mode = #tpu.pipeline_mode<synchronous>, transform_indices = @transform_2, window_bounds = array<i64: 1, 80>}, {pipeline_mode = #tpu.pipeline_mode<synchronous>, transform_indices = @transform_3, window_bounds = array<i64: 64, 32>}, {pipeline_mode = #tpu.pipeline_mode<synchronous>, transform_indices = @transform_4, window_bounds = array<i64: 1, 32>}, {pipeline_mode = #tpu.pipeline_mode<synchronous>, transform_indices = @transform_5, window_bounds = array<i64: 16, 16>}, {pipeline_mode = #tpu.pipeline_mode<synchronous>, transform_indices = @transform_6, window_bounds = array<i64: 1, 16>}, {transform_indices = @transform_7, window_bounds = array<i64: 4, 16>}, {transform_indices = @transform_8, window_bounds = array<i64: 4, 16>}]} {
    %c0 = arith.constant 0 : index
    %c0_0 = arith.constant 0 : index
    %0 = vector.load %arg1[%c0, %c0_0] : memref<4x16xf32, #tpu.memory_space<vmem>>, vector<4x16xf32>
    %c0_1 = arith.constant 0 : index
    %c0_2 = arith.constant 0 : index
    %1 = vector.load %arg2[%c0_1, %c0_2] : memref<16x80xf32, #tpu.memory_space<vmem>>, vector<16x80xf32>
    %cst = arith.constant dense<0.000000e+00> : vector<4x80xf32>
    %2 = tpu.matmul %0, %1, %cst {dimension_numbers = #tpu.dot_dimension_numbers<[1], [0], [0], [1], [0, 0, 1, 1], [], []>} : vector<4x16xf32>, vector<16x80xf32>, vector<4x80xf32> -> vector<4x80xf32>
    %c0_3 = arith.constant 0 : index
    %c0_4 = arith.constant 0 : index
    %3 = vector.load %arg3[%c0_3, %c0_4] : memref<1x80xf32, #tpu.memory_space<vmem>>, vector<1x80xf32>
    %4 = vector.broadcast %3 : vector<1x80xf32> to vector<4x80xf32>
    %5 = arith.addf %2, %4 : vector<4x80xf32>
    %6 = vector.extract_strided_slice %5 {offsets = [0, 0], sizes = [4, 64], strides = [1, 1]} : vector<4x80xf32> to vector<4x64xf32>
    %cst_5 = arith.constant 0.000000e+00 : f32
    %7 = vector.broadcast %cst_5 : f32 to vector<4x64xf32>
    %8 = arith.maximumf %6, %7 : vector<4x64xf32>
    %9 = vector.extract_strided_slice %5 {offsets = [0, 64], sizes = [4, 16], strides = [1, 1]} : vector<4x80xf32> to vector<4x16xf32>
    %c0_6 = arith.constant 0 : index
    %c0_7 = arith.constant 0 : index
    %10 = vector.load %arg4[%c0_6, %c0_7] : memref<64x32xf32, #tpu.memory_space<vmem>>, vector<64x32xf32>
    %cst_8 = arith.constant dense<0.000000e+00> : vector<4x32xf32>
    %11 = tpu.matmul %8, %10, %cst_8 {dimension_numbers = #tpu.dot_dimension_numbers<[1], [0], [0], [1], [0, 0, 1, 1], [], []>} : vector<4x64xf32>, vector<64x32xf32>, vector<4x32xf32> -> vector<4x32xf32>
    %c0_9 = arith.constant 0 : index
    %c0_10 = arith.constant 0 : index
    %12 = vector.load %arg5[%c0_9, %c0_10] : memref<1x32xf32, #tpu.memory_space<vmem>>, vector<1x32xf32>
    %13 = vector.broadcast %12 : vector<1x32xf32> to vector<4x32xf32>
    %14 = arith.addf %11, %13 : vector<4x32xf32>
    %15 = vector.extract_strided_slice %14 {offsets = [0, 0], sizes = [4, 16], strides = [1, 1]} : vector<4x32xf32> to vector<4x16xf32>
    %16 = arith.negf %15 : vector<4x16xf32>
    %17 = math.exp %16 : vector<4x16xf32>
    %cst_11 = arith.constant 1.000000e+00 : f32
    %18 = vector.broadcast %cst_11 : f32 to vector<4x16xf32>
    %19 = arith.addf %18, %17 : vector<4x16xf32>
    %20 = arith.divf %18, %19 : vector<4x16xf32>
    %21 = vector.extract_strided_slice %14 {offsets = [0, 16], sizes = [4, 16], strides = [1, 1]} : vector<4x32xf32> to vector<4x16xf32>
    %cst_12 = arith.constant 1.000000e+00 : f32
    %22 = vector.broadcast %cst_12 : f32 to vector<4x16xf32>
    %23 = arith.subf %22, %20 : vector<4x16xf32>
    %24 = arith.mulf %23, %9 : vector<4x16xf32>
    %25 = arith.mulf %20, %21 : vector<4x16xf32>
    %26 = arith.addf %24, %25 : vector<4x16xf32>
    %c0_13 = arith.constant 0 : index
    %c0_14 = arith.constant 0 : index
    %27 = vector.load %arg8[%c0_13, %c0_14] : memref<4x16xf32, #tpu.memory_space<vmem>>, vector<4x16xf32>
    tpu.vector_store %arg8[%c0_13, %c0_14], %26 {strides = array<i32>} : memref<4x16xf32, #tpu.memory_space<vmem>>, vector<4x16xf32>,
    %cst_15 = arith.constant 0.000000e+00 : f32
    %28 = vector.broadcast %cst_15 : f32 to vector<4x16xf32>
    %29 = arith.maximumf %21, %28 : vector<4x16xf32>
    %c0_16 = arith.constant 0 : index
    %c0_17 = arith.constant 0 : index
    %30 = vector.load %arg6[%c0_16, %c0_17] : memref<16x16xf32, #tpu.memory_space<vmem>>, vector<16x16xf32>
    %cst_18 = arith.constant dense<0.000000e+00> : vector<4x16xf32>
    %31 = tpu.matmul %29, %30, %cst_18 {dimension_numbers = #tpu.dot_dimension_numbers<[1], [0], [0], [1], [0, 0, 1, 1], [], []>} : vector<4x16xf32>, vector<16x16xf32>, vector<4x16xf32> -> vector<4x16xf32>
    %c0_19 = arith.constant 0 : index
    %c0_20 = arith.constant 0 : index
    %32 = vector.load %arg7[%c0_19, %c0_20] : memref<1x16xf32, #tpu.memory_space<vmem>>, vector<1x16xf32>
    %33 = vector.broadcast %32 : vector<1x16xf32> to vector<4x16xf32>
    %34 = arith.addf %31, %33 : vector<4x16xf32>
    %cst_21 = arith.constant 0.000000e+00 : f32
    %35 = vector.broadcast %cst_21 : f32 to vector<4x16xf32>
    %36 = arith.maximumf %34, %35 : vector<4x16xf32>
    %37 = vector.broadcast %cst_21 : f32 to vector<4x16xf32>
    %38 = arith.subf %34, %37 : vector<4x16xf32>
    %39 = arith.cmpf one, %38, %38 : vector<4x16xf32>
    %40 = vector.broadcast %cst_21 : f32 to vector<4x16xf32>
    %41 = arith.addf %34, %40 : vector<4x16xf32>
    %42 = math.absf %38 : vector<4x16xf32>
    %cst_22 = arith.constant 0.000000e+00 : f32
    %43 = vector.broadcast %cst_22 : f32 to vector<4x16xf32>
    %44 = arith.subf %43, %42 : vector<4x16xf32>
    %45 = math.exp %44 : vector<4x16xf32>
    %46 = math.log1p %45 : vector<4x16xf32>
    %47 = arith.addf %36, %46 : vector<4x16xf32>
    %48 = arith.select %39, %41, %47 : vector<4x16xi1>, vector<4x16xf32>
    %c0_23 = arith.constant 0 : index
    %c0_24 = arith.constant 0 : index
    %49 = vector.load %arg9[%c0_23, %c0_24] : memref<4x16xf32, #tpu.memory_space<vmem>>, vector<4x16xf32>
    tpu.vector_store %arg9[%c0_23, %c0_24], %48 {strides = array<i32>} : memref<4x16xf32, #tpu.memory_space<vmem>>, vector<4x16xf32>,
    return
  }
  func.func @transform_0(%arg0: i32) -> (i32, i32) {
    %c0_i32 = arith.constant 0 : i32
    %c0_i32_0 = arith.constant 0 : i32
    return %arg0, %c0_i32 : i32, i32
  }
  func.func @transform_1(%arg0: i32) -> (i32, i32) {
    %c0_i32 = arith.constant 0 : i32
    %c0_i32_0 = arith.constant 0 : i32
    %c0_i32_1 = arith.constant 0 : i32
    return %c0_i32, %c0_i32_0 : i32, i32
  }
  func.func @transform_2(%arg0: i32) -> (i32, i32) {
    %c0_i32 = arith.constant 0 : i32
    %c0_i32_0 = arith.constant 0 : i32
    %c0_i32_1 = arith.constant 0 : i32
    return %c0_i32, %c0_i32_0 : i32, i32
  }
  func.func @transform_3(%arg0: i32) -> (i32, i32) {
    %c0_i32 = arith.constant 0 : i32
    %c0_i32_0 = arith.constant 0 : i32
    %c0_i32_1 = arith.constant 0 : i32
    return %c0_i32, %c0_i32_0 : i32, i32
  }
  func.func @transform_4(%arg0: i32) -> (i32, i32) {
    %c0_i32 = arith.constant 0 : i32
    %c0_i32_0 = arith.constant 0 : i32
    %c0_i32_1 = arith.constant 0 : i32
    return %c0_i32, %c0_i32_0 : i32, i32
  }
  func.func @transform_5(%arg0: i32) -> (i32, i32) {
    %c0_i32 = arith.constant 0 : i32
    %c0_i32_0 = arith.constant 0 : i32
    %c0_i32_1 = arith.constant 0 : i32
    return %c0_i32, %c0_i32_0 : i32, i32
  }
  func.func @transform_6(%arg0: i32) -> (i32, i32) {
    %c0_i32 = arith.constant 0 : i32
    %c0_i32_0 = arith.constant 0 : i32
    %c0_i32_1 = arith.constant 0 : i32
    return %c0_i32, %c0_i32_0 : i32, i32
  }
  func.func @transform_7(%arg0: i32) -> (i32, i32) {
    %c0_i32 = arith.constant 0 : i32
    %c0_i32_0 = arith.constant 0 : i32
    return %arg0, %c0_i32 : i32, i32
  }
  func.func @transform_8(%arg0: i32) -> (i32, i32) {
    %c0_i32 = arith.constant 0 : i32
    %c0_i32_0 = arith.constant 0 : i32
    return %arg0, %c0_i32 : i32, i32
  }
}

</mosaic_0001>

<llo_original>
// kernel: tpu_custom_call.1
$region0: #{tpu_custom_call.1}
  #allocation0 [shape = 'u32[]', space=smem, size = 0x4, offset = 0x4, fixed_abs, tag = 'smem constant byte address 0x4 - core index']
  #allocation1 [shape = 'u32[144,128]{1,0:T(1,128)}', space=vmem, size = 0x12000, scoped, tag = 'internal scratch']
  %s0 = inlined_call_operand.vmem [shape: f32[4,16], index: 0, kind: input, shape index: {}]
  %s1 = inlined_call_operand.vmem [shape: f32[16,80], index: 1, kind: input, shape index: {}]
  %s2 = inlined_call_operand.vmem [shape: f32[1,80], index: 2, kind: input, shape index: {}]
  %s3 = inlined_call_operand.vmem [shape: f32[64,32], index: 3, kind: input, shape index: {}]
  %s4 = inlined_call_operand.vmem [shape: f32[1,32], index: 4, kind: input, shape index: {}]
  %s5 = inlined_call_operand.vmem [shape: f32[16,16], index: 5, kind: input, shape index: {}]
  %s6 = inlined_call_operand.vmem [shape: f32[1,16], index: 6, kind: input, shape index: {}]
  %s7 = inlined_call_operand.hbm [shape: f32[4,16], index: 7, kind: output, shape index: {0}]
  %s8 = inlined_call_operand.hbm [shape: f32[4,16], index: 8, kind: output, shape index: {1}]
  %9 = xla_tuple %s7, %s8
  %s10 = sld [smem:[#allocation0]]
  $region46: #{tpu_custom_call.1} parent=0
    _
  %s12 = ssub.s32 1, %s10
  %s13 = scalar_select 0, %s12, %s10
  $region1: #{tpu_custom_call.1} parent=0
    #allocation2 [shape = 'u8[2048]{0}', space=vmem, size = 0x800, scoped, tag = 'output window, operand 0, single buffered']
    #allocation3 [shape = 's32[1]{0}', space=sflag, size = 0x4, scoped, tag = 'scoped memory for tpu_custom_call.1']
    #allocation4 [shape = 'u8[2048]{0}', space=vmem, size = 0x800, scoped, tag = 'output window, operand 1, single buffered']
    #allocation5 [shape = 's32[1]{0}', space=sflag, size = 0x4, scoped, tag = 'scoped memory for tpu_custom_call.1']
    %14 = vsyncpa [#allocation3], 0
    %15 = vsyncpa [#allocation5], 0
    // Predicated region
    $region2: #{tpu_custom_call.1} parent=1 // pred_check
      _
    $region3: #{tpu_custom_call.1} parent=1 // pred_check_branch
      %17 = sbr.rel (0) target = $region5
    $region4: #{tpu_custom_call.1} parent=1 // pred_region
      _
    $region5: #{tpu_custom_call.1} parent=1 // pred_fallthru
      _
    // Predicated region
    $region6: #{tpu_custom_call.1} parent=1 // pred_check
      _
    $region7: #{tpu_custom_call.1} parent=1 // pred_check_branch
      %19 = sbr.rel (0) target = $region9
    $region8: #{tpu_custom_call.1} parent=1 // pred_region
      _
    $region9: #{tpu_custom_call.1} parent=1 // pred_fallthru
      _
    // Predicated region
    $region10: #{tpu_custom_call.1} parent=1 // pred_check
      _
    $region11: #{tpu_custom_call.1} parent=1 // pred_check_branch
      %21 = sbr.rel (0) target = $region13
    $region12: #{tpu_custom_call.1} parent=1 // pred_region
      _
    $region13: #{tpu_custom_call.1} parent=1 // pred_fallthru
      _
    // Predicated region
    $region14: #{tpu_custom_call.1} parent=1 // pred_check
      _
    $region15: #{tpu_custom_call.1} parent=1 // pred_check_branch
      %23 = sbr.rel (0) target = $region17
    $region16: #{tpu_custom_call.1} parent=1 // pred_region
      _
    $region17: #{tpu_custom_call.1} parent=1 // pred_fallthru
      _
    // Predicated region
    $region18: #{tpu_custom_call.1} parent=1 // pred_check
      _
    $region19: #{tpu_custom_call.1} parent=1 // pred_check_branch
      %25 = sbr.rel (0) target = $region21
    $region20: #{tpu_custom_call.1} parent=1 // pred_region
      _
    $region21: #{tpu_custom_call.1} parent=1 // pred_fallthru
      _
    // Predicated region
    $region22: #{tpu_custom_call.1} parent=1 // pred_check
      _
    $region23: #{tpu_custom_call.1} parent=1 // pred_check_branch
      %27 = sbr.rel (0) target = $region25
    $region24: #{tpu_custom_call.1} parent=1 // pred_region
      _
    $region25: #{tpu_custom_call.1} parent=1 // pred_fallthru
      _
    // Predicated region
    $region26: #{tpu_custom_call.1} parent=1 // pred_check
      _
    $region27: #{tpu_custom_call.1} parent=1 // pred_check_branch
      %29 = sbr.rel (0) target = $region29
    $region28: #{tpu_custom_call.1} parent=1 // pred_region
      _
    $region29: #{tpu_custom_call.1} parent=1 // pred_fallthru
      _
    %v30 = vld [vmem:[%s0] sm:$0xf]
    %v31 = vld [vmem:[%s1] sm:$0xff]
    %v32 = vld [vmem:[%s1 + $0x8] sm:$0xff]
    %v33 = vld [vmem:[%s2] sm:$0x1]
    %v35 = vlaneseq
    %v36 = vshrl.u32 %v35, 7
    %v37 = vsub.s32 0, %v36
    %v38 = vrot.slane %v33, %v37
    %vm40 = vcmask 130048
    %v42 = vsel %vm40, %v30, 0
    %44 = vmatprep.subr.mxu0 0.0
    %45 = vmatpush1.msra.mxu0 %v31
    %46 = vmatprep.subr.mxu0 0.0
    %47 = vmatpush1.msra.mxu0 %v32
    %48 = vmatprep.subr.mxu0 0.0
    %49 = vmatpush1.msra.mxu0 0.0
    %50 = vmatprep.subr.mxu0 0.0
    %51 = vmatpush1.msra.mxu0 0.0
    %52 = vmatprep.subr.mxu0 0.0
    %53 = vmatpush1.msra.mxu0 0.0
    %54 = vmatprep.subr.mxu0 0.0
    %55 = vmatpush1.msra.mxu0 0.0
    %56 = vmatprep.subr.mxu0 0.0
    %57 = vmatpush1.msra.mxu0 0.0
    %58 = vmatprep.subr.mxu0 0.0
    %59 = vmatpush1.msra.mxu0 0.0
    %60 = vmatprep.subr.mxu0 0.0
    %61 = vmatpush1.msra.mxu0 0.0
    %62 = vmatprep.subr.mxu0 0.0
    %63 = vmatpush1.msra.mxu0 0.0
    %64 = vmatprep.subr.mxu0 0.0
    %65 = vmatpush1.msra.mxu0 0.0
    %66 = vmatprep.subr.mxu0 0.0
    %67 = vmatpush1.msra.mxu0 0.0
    %68 = vmatprep.subr.mxu0 0.0
    %69 = vmatpush1.msra.mxu0 0.0
    %70 = vmatprep.subr.mxu0 0.0
    %71 = vmatpush1.msra.mxu0 0.0
    %72 = vmatprep.subr.mxu0 0.0
    %73 = vmatpush1.msra.mxu0 0.0
    %74 = vmatprep.subr.mxu0 0.0
    %75 = vmatpush1.msra.mxu0 0.0
    %76 = vmatprep.subr.mxu0 0.0
    %77 = vmatpush1.msra.mxu0 0.0
    %78 = vmatprep.subr.mxu0 0.0
    %79 = vmatpush1.msra.mxu0 0.0
    %80 = vmatprep.subr.mxu0 0.0
    %81 = vmatpush1.msra.mxu0 0.0
    %82 = vmatprep.subr.mxu0 0.0
    %83 = vmatpush1.msra.mxu0 0.0
    %84 = vmatprep.subr.mxu0 0.0
    %85 = vmatpush1.msra.mxu0 0.0
    %86 = vmatprep.subr.mxu0 0.0
    %87 = vmatpush1.msra.mxu0 0.0
    %88 = vmatprep.subr.mxu0 0.0
    %89 = vmatpush1.msra.mxu0 0.0
    %90 = vmatprep.subr.mxu0 0.0
    %91 = vmatpush1.msra.mxu0 0.0
    %92 = vmatprep.subr.mxu0 0.0
    %93 = vmatpush1.msra.mxu0 0.0
    %94 = vmatprep.subr.mxu0 0.0
    %95 = vmatpush1.msra.mxu0 0.0
    %96 = vmatprep.subr.mxu0 0.0
    %97 = vmatpush1.msra.mxu0 0.0
    %98 = vmatprep.subr.mxu0 0.0
    %99 = vmatpush1.msra.mxu0 0.0
    %100 = vmatprep.subr.mxu0 0.0
    %101 = vmatpush1.msra.mxu0 0.0
    %102 = vmatprep.subr.mxu0 0.0
    %103 = vmatpush1.msra.mxu0 0.0
    %104 = vmatprep.subr.mxu0 0.0
    %105 = vmatpush1.msra.mxu0 0.0
    %106 = vmatprep.subr.mxu0 0.0
    %107 = vmatpush1.msra.mxu0 0.0
    %108 = vmatprep.mubr.f32.mxu0 0.0
    %109 = vmatmul.mubr.f32.gmra.mrb[0].mxu0 %v42
    %v110 = vpop.f32.mrb[0].mxu0
    %v111 = vadd.f32 %v38, %v110
    %v112 = vpop.f32.mrb[0].mxu0
    %113 = vdwg.mxu0
    %v114 = vmax.f32 %v111, 0.0
    %v115 = vld [vmem:[%s3] sm:$0xff]
    %v116 = vld [vmem:[%s3 + $0x8] sm:$0xff]
    %v117 = vld [vmem:[%s3 + $0x10] sm:$0xff]
    %v118 = vld [vmem:[%s3 + $0x18] sm:$0xff]
    %v119 = vld [vmem:[%s3 + $0x20] sm:$0xff]
    %v120 = vld [vmem:[%s3 + $0x28] sm:$0xff]
    %v121 = vld [vmem:[%s3 + $0x30] sm:$0xff]
    %v122 = vld [vmem:[%s3 + $0x38] sm:$0xff]
    %v123 = vld [vmem:[%s4] sm:$0x1]
    %v125 = vlaneseq
    %v126 = vshrl.u32 %v125, 7
    %v127 = vsub.s32 0, %v126
    %v128 = vrot.slane %v123, %v127
    %vm130 = vcmask 523264
    %v132 = vsel %vm130, %v114, 0
    %134 = vmatprep.subr.mxu0 0.0
    %135 = vmatpush1.msra.mxu0 %v115
    %136 = vmatprep.subr.mxu0 0.0
    %137 = vmatpush1.msra.mxu0 %v116
    %138 = vmatprep.subr.mxu0 0.0
    %139 = vmatpush1.msra.mxu0 %v117
    %140 = vmatprep.subr.mxu0 0.0
    %141 = vmatpush1.msra.mxu0 %v118
    %142 = vmatprep.subr.mxu0 0.0
    %143 = vmatpush1.msra.mxu0 %v119
    %144 = vmatprep.subr.mxu0 0.0
    %145 = vmatpush1.msra.mxu0 %v120
    %146 = vmatprep.subr.mxu0 0.0
    %147 = vmatpush1.msra.mxu0 %v121
    %148 = vmatprep.subr.mxu0 0.0
    %149 = vmatpush1.msra.mxu0 %v122
    %150 = vmatprep.subr.mxu0 0.0
    %151 = vmatpush1.msra.mxu0 0.0
    %152 = vmatprep.subr.mxu0 0.0
    %153 = vmatpush1.msra.mxu0 0.0
    %154 = vmatprep.subr.mxu0 0.0
    %155 = vmatpush1.msra.mxu0 0.0
    %156 = vmatprep.subr.mxu0 0.0
    %157 = vmatpush1.msra.mxu0 0.0
    %158 = vmatprep.subr.mxu0 0.0
    %159 = vmatpush1.msra.mxu0 0.0
    %160 = vmatprep.subr.mxu0 0.0
    %161 = vmatpush1.msra.mxu0 0.0
    %162 = vmatprep.subr.mxu0 0.0
    %163 = vmatpush1.msra.mxu0 0.0
    %164 = vmatprep.subr.mxu0 0.0
    %165 = vmatpush1.msra.mxu0 0.0
    %166 = vmatprep.subr.mxu0 0.0
    %167 = vmatpush1.msra.mxu0 0.0
    %168 = vmatprep.subr.mxu0 0.0
    %169 = vmatpush1.msra.mxu0 0.0
    %170 = vmatprep.subr.mxu0 0.0
    %171 = vmatpush1.msra.mxu0 0.0
    %172 = vmatprep.subr.mxu0 0.0
    %173 = vmatpush1.msra.mxu0 0.0
    %174 = vmatprep.subr.mxu0 0.0
    %175 = vmatpush1.msra.mxu0 0.0
    %176 = vmatprep.subr.mxu0 0.0
    %177 = vmatpush1.msra.mxu0 0.0
    %178 = vmatprep.subr.mxu0 0.0
    %179 = vmatpush1.msra.mxu0 0.0
    %180 = vmatprep.subr.mxu0 0.0
    %181 = vmatpush1.msra.mxu0 0.0
    %182 = vmatprep.subr.mxu0 0.0
    %183 = vmatpush1.msra.mxu0 0.0
    %184 = vmatprep.subr.mxu0 0.0
    %185 = vmatpush1.msra.mxu0 0.0
    %186 = vmatprep.subr.mxu0 0.0
    %187 = vmatpush1.msra.mxu0 0.0
    %188 = vmatprep.subr.mxu0 0.0
    %189 = vmatpush1.msra.mxu0 0.0
    %190 = vmatprep.subr.mxu0 0.0
    %191 = vmatpush1.msra.mxu0 0.0
    %192 = vmatprep.subr.mxu0 0.0
    %193 = vmatpush1.msra.mxu0 0.0
    %194 = vmatprep.subr.mxu0 0.0
    %195 = vmatpush1.msra.mxu0 0.0
    %196 = vmatprep.subr.mxu0 0.0
    %197 = vmatpush1.msra.mxu0 0.0
    %198 = vmatprep.mubr.f32.mxu0 0.0
    %199 = vmatmul.mubr.f32.gmra.mrb[0].mxu0 %v132
    %v200 = vpop.f32.mrb[0].mxu0
    %v201 = vadd.f32 %v128, %v200
    %v202 = vpop.f32.mrb[0].mxu0
    %203 = vdwg.mxu0
    %v204 = vxor.u32 %v201, 2147483648
    %v205 = vmul.f32 %v204, 1.442695
    %v206 = vpow.pop %v205
    %v207 = vadd.f32 %v206, 1.0
    %v208 = vrcp.pop %v207
    %v209 = vmul.f32 1.0, %v208
    %v210 = vsub.f32 1.0, %v209
    %212 = vrot.lane.b32.xlu0 %v111, 64
    %v213 = vpop.permute.xlu0 %212
    %v215 = vmul.f32 %v210, %v213
    %217 = vrot.lane.b32.xlu0 %v201, 112
    %v218 = vpop.permute.xlu0 %217
    %v220 = vmul.f32 %v209, %v218
    %v221 = vadd.f32 %v215, %v220
    %vm222 = vcmask 125952
    %223 = vst.msk [vmem:[#allocation2] sm:$0xf] %vm222, %v221
    %v224 = vmax.f32 %v201, 0.0
    %v225 = vld [vmem:[%s5] sm:$0xff]
    %v226 = vld [vmem:[%s5 + $0x8] sm:$0xff]
    %v227 = vld [vmem:[%s6] sm:$0x1]
    %v229 = vlaneseq
    %v230 = vshrl.u32 %v229, 7
    %v231 = vsub.s32 0, %v230
    %v232 = vrot.slane %v227, %v231
    %235 = vrot.lane.b32.xlu0 %v224, 112
    %v236 = vpop.permute.xlu0 %235
    %v237 = vsel %vm40, %v236, 0
    %239 = vmatprep.subr.mxu0 0.0
    %240 = vmatpush1.msra.mxu0 %v225
    %241 = vmatprep.subr.mxu0 0.0
    %242 = vmatpush1.msra.mxu0 %v226
    %243 = vmatprep.subr.mxu0 0.0
    %244 = vmatpush1.msra.mxu0 0.0
    %245 = vmatprep.subr.mxu0 0.0
    %246 = vmatpush1.msra.mxu0 0.0
    %247 = vmatprep.subr.mxu0 0.0
    %248 = vmatpush1.msra.mxu0 0.0
    %249 = vmatprep.subr.mxu0 0.0
    %250 = vmatpush1.msra.mxu0 0.0
    %251 = vmatprep.subr.mxu0 0.0
    %252 = vmatpush1.msra.mxu0 0.0
    %253 = vmatprep.subr.mxu0 0.0
    %254 = vmatpush1.msra.mxu0 0.0
    %255 = vmatprep.subr.mxu0 0.0
    %256 = vmatpush1.msra.mxu0 0.0
    %257 = vmatprep.subr.mxu0 0.0
    %258 = vmatpush1.msra.mxu0 0.0
    %259 = vmatprep.subr.mxu0 0.0
    %260 = vmatpush1.msra.mxu0 0.0
    %261 = vmatprep.subr.mxu0 0.0
    %262 = vmatpush1.msra.mxu0 0.0
    %263 = vmatprep.subr.mxu0 0.0
    %264 = vmatpush1.msra.mxu0 0.0
    %265 = vmatprep.subr.mxu0 0.0
    %266 = vmatpush1.msra.mxu0 0.0
    %267 = vmatprep.subr.mxu0 0.0
    %268 = vmatpush1.msra.mxu0 0.0
    %269 = vmatprep.subr.mxu0 0.0
    %270 = vmatpush1.msra.mxu0 0.0
    %271 = vmatprep.subr.mxu0 0.0
    %272 = vmatpush1.msra.mxu0 0.0
    %273 = vmatprep.subr.mxu0 0.0
    %274 = vmatpush1.msra.mxu0 0.0
    %275 = vmatprep.subr.mxu0 0.0
    %276 = vmatpush1.msra.mxu0 0.0
    %277 = vmatprep.subr.mxu0 0.0
    %278 = vmatpush1.msra.mxu0 0.0
    %279 = vmatprep.subr.mxu0 0.0
    %280 = vmatpush1.msra.mxu0 0.0
    %281 = vmatprep.subr.mxu0 0.0
    %282 = vmatpush1.msra.mxu0 0.0
    %283 = vmatprep.subr.mxu0 0.0
    %284 = vmatpush1.msra.mxu0 0.0
    %285 = vmatprep.subr.mxu0 0.0
    %286 = vmatpush1.msra.mxu0 0.0
    %287 = vmatprep.subr.mxu0 0.0
    %288 = vmatpush1.msra.mxu0 0.0
    %289 = vmatprep.subr.mxu0 0.0
    %290 = vmatpush1.msra.mxu0 0.0
    %291 = vmatprep.subr.mxu0 0.0
    %292 = vmatpush1.msra.mxu0 0.0
    %293 = vmatprep.subr.mxu0 0.0
    %294 = vmatpush1.msra.mxu0 0.0
    %295 = vmatprep.subr.mxu0 0.0
    %296 = vmatpush1.msra.mxu0 0.0
    %297 = vmatprep.subr.mxu0 0.0
    %298 = vmatpush1.msra.mxu0 0.0
    %299 = vmatprep.subr.mxu0 0.0
    %300 = vmatpush1.msra.mxu0 0.0
    %301 = vmatprep.subr.mxu0 0.0
    %302 = vmatpush1.msra.mxu0 0.0
    %303 = vmatprep.mubr.f32.mxu0 0.0
    %304 = vmatmul.mubr.f32.gmra.mrb[0].mxu0 %v237
    %v305 = vpop.f32.mrb[0].mxu0
    %v306 = vadd.f32 %v232, %v305
    %v307 = vpop.f32.mrb[0].mxu0
    %308 = vdwg.mxu0
    %v309 = vmax.f32 %v306, 0.0
    %vm310 = vcmp.ne.f32.partialorder %v306, %v306
    %v311 = vadd.f32 %v306, 0.0
    %v312 = vand.u32 2147483647, %v306
    %v313 = vsub.f32 0.0, %v312
    %v314 = vmul.f32 %v313, 1.442695
    %v315 = vpow.pop %v314
    %v316 = vadd.f32 %v315, 1.0
    %v317 = vlog2.pop %v316
    %v318 = vmul.f32 %v317, 0.6931472
    %v319 = vmul.f32 -0.5, %v315
    %v320 = vadd.f32 %v319, 1.0
    %v321 = vmul.f32 %v320, %v315
    %v322 = vand.u32 2147483647, %v315
    %vm323 = vcmp.lt.f32.partialorder %v322, 0.0004427343
    %v324 = vsel %vm323, %v321, %v318
    %v325 = vadd.f32 %v309, %v324
    %v326 = vsel %vm310, %v311, %v325
    %327 = vst.msk [vmem:[#allocation4] sm:$0xf] %vm222, %v326
    // Predicated region
    $region30: #{tpu_custom_call.1} parent=1 // pred_check
      _
    $region31: #{tpu_custom_call.1} parent=1 // pred_check_branch
      %329 = sbr.rel (0) target = $region33
    $region32: #{tpu_custom_call.1} parent=1 // pred_region
      %s331 = ssub.s32 64, 64
      %332 = vsyncadd [#allocation3], %s331
      %s334 = sshll.u32 [#allocation2], 4
      %s335 = int_to_ptr.vmem [resolvable:$true] %s334
      %337 = dma.vmem_to_hbm [thread:$0]  %s335, 64, %s7, [#allocation3]
    $region33: #{tpu_custom_call.1} parent=1 // pred_fallthru
      _
    // Predicated region
    $region34: #{tpu_custom_call.1} parent=1 // pred_check
      _
    $region35: #{tpu_custom_call.1} parent=1 // pred_check_branch
      %339 = sbr.rel (0) target = $region37
    $region36: #{tpu_custom_call.1} parent=1 // pred_region
      %s341 = ssub.s32 64, 64
      %342 = vsyncadd [#allocation5], %s341
      %s344 = sshll.u32 [#allocation4], 4
      %s345 = int_to_ptr.vmem [resolvable:$true] %s344
      %347 = dma.vmem_to_hbm [thread:$0]  %s345, 64, %s8, [#allocation5]
    $region37: #{tpu_custom_call.1} parent=1 // pred_fallthru
      _
    // Predicated region
    $region38: #{tpu_custom_call.1} parent=1 // pred_check
      _
    $region39: #{tpu_custom_call.1} parent=1 // pred_check_branch
      %349 = sbr.rel (0) target = $region41
    $region40: #{tpu_custom_call.1} parent=1 // pred_region
      %350 = dma.done [#allocation3], 64
    $region41: #{tpu_custom_call.1} parent=1 // pred_fallthru
      _
    // Predicated region
    $region42: #{tpu_custom_call.1} parent=1 // pred_check
      _
    $region43: #{tpu_custom_call.1} parent=1 // pred_check_branch
      %352 = sbr.rel (0) target = $region45
    $region44: #{tpu_custom_call.1} parent=1 // pred_region
      %353 = dma.done [#allocation5], 64
    $region45: #{tpu_custom_call.1} parent=1 // pred_fallthru
      _
    %354 = vsyncpa [#allocation3], 1
    %355 = vsyncpa [#allocation5], 1

</llo_original>
